<compile_context>
chip_gen: v6e
topology: v6e:2x2x1
jax: 0.10.0
libtpu: 0.0.40
codegen_flags: <defaults>
</compile_context>

<pallas_src>
import functools

import jax
import jax.numpy as jnp
from jax.experimental import pallas as pl
from jax.experimental.pallas import tpu as pltpu


def graphite_kernel(x_ref, adj_ref, t_ref,
                    w1_ref, w2_ref, w3_ref, wd1_ref, wd2_ref, wd3_ref,
                    recon_ref, mu_ref, logvar_ref,
                    *, autoregressive_scalar):
    f32 = jnp.float32
    bf16 = jnp.bfloat16
    N = adj_ref.shape[0]
    H = wd1_ref.shape[0]

    x = x_ref[...]                               # (N, F) f32
    adj_bf = adj_ref[...]                        # (N, N) bf16 (cast in wrapper)
    x_bf = x.astype(bf16)

    # ---------------- encoder ----------------
    # gc1 reassociated: relu((adj @ x) @ W1) -- the N^2 pass has width F (< H).
    ax = jnp.dot(adj_bf, x_bf, preferred_element_type=f32)                  # (N, F)
    hidden1 = jnp.maximum(
        jnp.dot(ax, w1_ref[...], preferred_element_type=f32), 0.0)          # (N, H)

    # gc2 / gc3 share one N^2 pass (adj @ hidden1); then two small lane-dense GEMMs.
    ah = jnp.dot(adj_bf, hidden1.astype(bf16), preferred_element_type=f32)  # (N, H)
    mu = jnp.dot(ah, w2_ref[...], preferred_element_type=f32)               # (N, H)
    logvar = jnp.dot(ah, w3_ref[...], preferred_element_type=f32)           # (N, H)
    mu_ref[...] = mu
    logvar_ref[...] = logvar

    # reparameterize: eval mode -> z0 = mu (no noise).
    z0 = mu
    z0_bf = z0.astype(bf16)

    # ---------------- sampled decoder adjacency ----------------
    # Sigmoid-free Bernoulli sample:  u < sigmoid(l)  <=>  l > logit(u).
    # t is symmetric and the einsum accumulation order is symmetric, so adj_s is
    # symmetric by construction; it is the ONLY resident (N, N) decoder buffer (bf16).
    logits = jnp.einsum('id,jd->ij', z0_bf, z0_bf,
                        preferred_element_type=f32)                         # z0 @ z0.T
    adj_s_bf = (logits > t_ref[...]).astype(bf16)                           # (N, N) bf16

    # TODO(synk): sample_graph / normalize_adj sources were not provided; assuming a
    # symmetric Bernoulli sample and D^-1/2 A D^-1/2 normalization (no self-loops).
    # Degrees via MXU matvec with f32 accumulation (exact for 0/1 entries); symmetry
    # means one degree vector serves for both row and column normalization.
    ones_col = jnp.ones((N, 1), bf16)
    deg = jnp.dot(adj_s_bf, ones_col, preferred_element_type=f32)           # (N, 1)
    d = jax.lax.rsqrt(jnp.maximum(deg, 1e-12))   # zero-degree rows stay zero downstream

    # ---------------- graphite decoder (normalization folded into operands) -------
    # A_norm @ M == d * (adj_s @ (d * M));  gd1/gd2 share one adj pass over [z0 | x].
    zx = jnp.concatenate([z0, x], axis=1)                                   # (N, H+F)
    anzx = d * jnp.dot(adj_s_bf, (d * zx).astype(bf16),
                       preferred_element_type=f32)                          # (N, H+F)
    z1 = jnp.maximum(
        jnp.dot(anzx[:, :H], wd1_ref[...], preferred_element_type=f32), 0.0)
    z2 = jnp.maximum(
        jnp.dot(anzx[:, H:], wd2_ref[...], preferred_element_type=f32), 0.0)
    z12 = z1 + z2                                                           # (N, H)

    # gd3: A_norm @ ((z1 + z2) @ Wd3), normalization folded the same way.
    s3 = jnp.dot(z12, wd3_ref[...], preferred_element_type=f32)             # (N, H)
    z3 = d * jnp.dot(adj_s_bf, (d * s3).astype(bf16),
                     preferred_element_type=f32)                            # (N, H)

    s = autoregressive_scalar
    z4 = (1.0 - s) * z0 + s * z3
    z4_bf = z4.astype(bf16)

    # InnerProductDecoder (act = identity, dropout inactive in eval): z4 @ z4.T.
    recon_ref[...] = jnp.einsum('id,jd->ij', z4_bf, z4_bf,
                                preferred_element_type=f32)


def graphite_forward(x, adj, uniforms, params, autoregressive_scalar=0.5):
    """Whole graph fits in VMEM at these sizes: single grid-less pallas_call with
    full-array blocks (full-array blocks are exempt from the (8,128) rule)."""
    N, F = x.shape
    H = params["w1"].shape[1]
    f32 = jnp.float32

    # Symmetrize the Bernoulli uniforms (sample the upper triangle, mirror it) and
    # map them to logit space so the kernel samples with a plain compare.
    u = jnp.triu(uniforms) + jnp.triu(uniforms, 1).T
    u = jnp.clip(u, 1e-7, 1.0 - 1e-7)
    t = jnp.log(u) - jnp.log1p(-u)                                   # logit(u), f32

    # Adjacency travels HBM->VMEM in bf16 (halved DMA, no in-kernel cast buffer).
    adj_bf = adj.astype(jnp.bfloat16)

    kernel = functools.partial(graphite_kernel,
                               autoregressive_scalar=autoregressive_scalar)

    vmem = pl.BlockSpec(memory_space=pltpu.MemorySpace.VMEM)
    out_shape = (
        jax.ShapeDtypeStruct((N, N), f32),   # reconstructed adjacency logits
        jax.ShapeDtypeStruct((N, H), f32),   # mu
        jax.ShapeDtypeStruct((N, H), f32),   # logvar
    )

    # VMEM footprint estimate: 3 f32 N^2 (logits, t, recon) + 2 bf16 N^2 (adj in,
    # sampled adj) + activations / weights, with 3x slack for compiler temporaries.
    n2 = N * N
    weight_elems = 2 * F * H + 4 * H * H
    est = 4 * (3 * n2 + 12 * N * (H + F) + weight_elems) + 2 * (2 * n2)
    try:
        cap = getattr(pltpu.get_tpu_info(), "vmem_capacity_bytes",
                      128 * 1024 * 1024)
    except Exception:  # pragma: no cover - defensive on non-TPU tracing hosts
        cap = 128 * 1024 * 1024
    # ~22% headroom for Mosaic scratch / output buffers: ~50 MiB on v7x, ~100 MiB on
    # v5e/v6e. Floor of 16 MiB covers the v5e scoped default being too small.
    vmem_limit = int(min(max(3 * est, 16 * 1024 * 1024), int(0.78 * cap)))

    flops = 2 * n2 * (2 * F + 5 * H + 1) + 2 * N * weight_elems
    bytes_accessed = 2 * n2 + 4 * n2 + 4 * n2 + 4 * (N * F + weight_elems + 2 * N * H)
    cost = pl.CostEstimate(flops=int(flops), transcendentals=int(N),
                           bytes_accessed=int(bytes_accessed))

    recon, mu, logvar = pl.pallas_call(
        kernel,
        out_shape=out_shape,
        in_specs=[vmem] * 9,
        out_specs=(vmem, vmem, vmem),
        compiler_params=pltpu.CompilerParams(vmem_limit_bytes=vmem_limit),
        cost_estimate=cost,
    )(x, adj_bf, t, params["w1"], params["w2"], params["w3"],
      params["wd1"], params["wd2"], params["wd3"])

    return recon, mu, logvar


def init_params(key, nfeat, nhid):
    """Deterministic init mirroring GraphConvolution.reset_parameters:
    uniform(-stdv, stdv) with stdv = 1/sqrt(out_features)."""
    def glorot(k, shape):
        stdv = 1.0 / jnp.sqrt(jnp.float32(shape[1]))
        return jax.random.uniform(k, shape, jnp.float32, -stdv, stdv)

    ks = jax.random.split(key, 6)
    return {
        "w1": glorot(ks[0], (nfeat, nhid)),   # gc1
        "w2": glorot(ks[1], (nhid, nhid)),    # gc2
        "w3": glorot(ks[2], (nhid, nhid)),    # gc3
        "wd1": glorot(ks[3], (nhid, nhid)),   # gd1
        "wd2": glorot(ks[4], (nfeat, nhid)),  # gd2
        "wd3": glorot(ks[5], (nhid, nhid)),   # gd3
    }


if __name__ == "__main__":
    N, NFEAT, NHID = 16, 8, 32

    key = jax.random.PRNGKey(0)
    k_x, k_adj, k_u, k_params = jax.random.split(key, 4)

    # Node features.
    x = jax.random.normal(k_x, (N, NFEAT), jnp.float32)

    # Input adjacency: random symmetric graph with self-loops, sym-normalized (glue).
    a = (jax.random.uniform(k_adj, (N, N)) < 0.3).astype(jnp.float32)
    a = jnp.maximum(a, a.T) + jnp.eye(N, dtype=jnp.float32)
    a = jnp.minimum(a, 1.0)
    d = jnp.sum(a, axis=1, keepdims=True)
    d_is = jnp.where(d > 0, 1.0 / jnp.sqrt(d), 0.0)
    adj = a * d_is * d_is.T

    # Deterministic uniforms for sample_graph's Bernoulli draw (symmetrized in wrapper).
    uniforms = jax.random.uniform(k_u, (N, N), jnp.float32)

    params = init_params(k_params, NFEAT, NHID)

    recon, mu, logvar = graphite_forward(x, adj, uniforms, params,
                                         autoregressive_scalar=0.5)
    jax.block_until_ready((recon, mu, logvar))

    assert recon.shape == (N, N)
    assert mu.shape == (N, NHID)
    assert logvar.shape == (N, NHID)
    assert bool(jnp.all(jnp.isfinite(recon)))
    assert bool(jnp.all(jnp.isfinite(mu)))
    assert bool(jnp.all(jnp.isfinite(logvar)))
    print("KERNEL_OK")
</pallas_src>

<mosaic_0001>
module attributes {stable_mosaic.version = 11 : i64} {
  func.func @graphite_kernel(%arg0: memref<16x8xf32, #tpu.memory_space<vmem>>, %arg1: memref<16x16xbf16, #tpu.memory_space<vmem>>, %arg2: memref<16x16xf32, #tpu.memory_space<vmem>>, %arg3: memref<8x32xf32, #tpu.memory_space<vmem>>, %arg4: memref<32x32xf32, #tpu.memory_space<vmem>>, %arg5: memref<32x32xf32, #tpu.memory_space<vmem>>, %arg6: memref<32x32xf32, #tpu.memory_space<vmem>>, %arg7: memref<8x32xf32, #tpu.memory_space<vmem>>, %arg8: memref<32x32xf32, #tpu.memory_space<vmem>>, %arg9: memref<16x16xf32, #tpu.memory_space<vmem>>, %arg10: memref<16x32xf32, #tpu.memory_space<vmem>>, %arg11: memref<16x32xf32, #tpu.memory_space<vmem>>) attributes {dimension_semantics = [], scalar_prefetch = 0 : i64, scratch_operands = 0 : i64, tpu.core_type = #tpu.core_type<tc>} {
    %c0 = arith.constant 0 : index
    %c0_0 = arith.constant 0 : index
    %0 = vector.load %arg0[%c0, %c0_0] : memref<16x8xf32, #tpu.memory_space<vmem>>, vector<16x8xf32>
    %c0_1 = arith.constant 0 : index
    %c0_2 = arith.constant 0 : index
    %1 = vector.load %arg1[%c0_1, %c0_2] : memref<16x16xbf16, #tpu.memory_space<vmem>>, vector<16x16xbf16>
    %2 = arith.truncf %0 : vector<16x8xf32> to vector<16x8xbf16>
    %cst = arith.constant dense<0.000000e+00> : vector<16x8xf32>
    %3 = tpu.matmul %1, %2, %cst {dimension_numbers = #tpu.dot_dimension_numbers<[1], [0], [0], [1], [0, 0, 1, 1], [], []>} : vector<16x16xbf16>, vector<16x8xbf16>, vector<16x8xf32> -> vector<16x8xf32>
    %c0_3 = arith.constant 0 : index
    %c0_4 = arith.constant 0 : index
    %4 = vector.load %arg3[%c0_3, %c0_4] : memref<8x32xf32, #tpu.memory_space<vmem>>, vector<8x32xf32>
    %cst_5 = arith.constant dense<0.000000e+00> : vector<16x32xf32>
    %5 = tpu.matmul %3, %4, %cst_5 {dimension_numbers = #tpu.dot_dimension_numbers<[1], [0], [0], [1], [0, 0, 1, 1], [], []>} : vector<16x8xf32>, vector<8x32xf32>, vector<16x32xf32> -> vector<16x32xf32>
    %cst_6 = arith.constant 0.000000e+00 : f32
    %6 = vector.broadcast %cst_6 : f32 to vector<16x32xf32>
    %7 = arith.maximumf %5, %6 : vector<16x32xf32>
    %8 = arith.truncf %7 : vector<16x32xf32> to vector<16x32xbf16>
    %cst_7 = arith.constant dense<0.000000e+00> : vector<16x32xf32>
    %9 = tpu.matmul %1, %8, %cst_7 {dimension_numbers = #tpu.dot_dimension_numbers<[1], [0], [0], [1], [0, 0, 1, 1], [], []>} : vector<16x16xbf16>, vector<16x32xbf16>, vector<16x32xf32> -> vector<16x32xf32>
    %c0_8 = arith.constant 0 : index
    %c0_9 = arith.constant 0 : index
    %10 = vector.load %arg4[%c0_8, %c0_9] : memref<32x32xf32, #tpu.memory_space<vmem>>, vector<32x32xf32>
    %cst_10 = arith.constant dense<0.000000e+00> : vector<16x32xf32>
    %11 = tpu.matmul %9, %10, %cst_10 {dimension_numbers = #tpu.dot_dimension_numbers<[1], [0], [0], [1], [0, 0, 1, 1], [], []>} : vector<16x32xf32>, vector<32x32xf32>, vector<16x32xf32> -> vector<16x32xf32>
    %c0_11 = arith.constant 0 : index
    %c0_12 = arith.constant 0 : index
    %12 = vector.load %arg5[%c0_11, %c0_12] : memref<32x32xf32, #tpu.memory_space<vmem>>, vector<32x32xf32>
    %cst_13 = arith.constant dense<0.000000e+00> : vector<16x32xf32>
    %13 = tpu.matmul %9, %12, %cst_13 {dimension_numbers = #tpu.dot_dimension_numbers<[1], [0], [0], [1], [0, 0, 1, 1], [], []>} : vector<16x32xf32>, vector<32x32xf32>, vector<16x32xf32> -> vector<16x32xf32>
    %c0_14 = arith.constant 0 : index
    %c0_15 = arith.constant 0 : index
    %14 = vector.load %arg10[%c0_14, %c0_15] : memref<16x32xf32, #tpu.memory_space<vmem>>, vector<16x32xf32>
    tpu.vector_store %arg10[%c0_14, %c0_15], %11 {strides = array<i32>} : memref<16x32xf32, #tpu.memory_space<vmem>>, vector<16x32xf32>,
    %c0_16 = arith.constant 0 : index
    %c0_17 = arith.constant 0 : index
    %15 = vector.load %arg11[%c0_16, %c0_17] : memref<16x32xf32, #tpu.memory_space<vmem>>, vector<16x32xf32>
    tpu.vector_store %arg11[%c0_16, %c0_17], %13 {strides = array<i32>} : memref<16x32xf32, #tpu.memory_space<vmem>>, vector<16x32xf32>,
    %16 = arith.truncf %11 : vector<16x32xf32> to vector<16x32xbf16>
    "tpu.trace_start"() <{level = 10 : i32, message = "id,jd->ij"}> : () -> ()
    %cst_18 = arith.constant dense<0.000000e+00> : vector<16x16xf32>
    %17 = tpu.matmul %16, %16, %cst_18 {dimension_numbers = #tpu.dot_dimension_numbers<[1], [1], [0], [0], [0, 0, 1, 0], [], []>} : vector<16x32xbf16>, vector<16x32xbf16>, vector<16x16xf32> -> vector<16x16xf32>
    "tpu.trace_stop"() : () -> ()
    %c0_19 = arith.constant 0 : index
    %c0_20 = arith.constant 0 : index
    %18 = vector.load %arg2[%c0_19, %c0_20] : memref<16x16xf32, #tpu.memory_space<vmem>>, vector<16x16xf32>
    %19 = arith.cmpf ogt, %17, %18 : vector<16x16xf32>
    %20 = arith.extui %19 : vector<16x16xi1> to vector<16x16xi32>
    %21 = arith.sitofp %20 : vector<16x16xi32> to vector<16x16xf32>
    %22 = arith.truncf %21 : vector<16x16xf32> to vector<16x16xbf16>
    %cst_21 = arith.constant 1.000000e+00 : bf16
    %23 = vector.broadcast %cst_21 : bf16 to vector<16x1xbf16>
    %cst_22 = arith.constant dense<0.000000e+00> : vector<16x1xf32>
    %24 = tpu.matmul %22, %23, %cst_22 {dimension_numbers = #tpu.dot_dimension_numbers<[1], [0], [0], [1], [0, 0, 1, 1], [], []>} : vector<16x16xbf16>, vector<16x1xbf16>, vector<16x1xf32> -> vector<16x1xf32>
    %cst_23 = arith.constant 9.99999996E-13 : f32
    %25 = vector.broadcast %cst_23 : f32 to vector<16x1xf32>
    %26 = arith.maximumf %24, %25 : vector<16x1xf32>
    %27 = math.rsqrt %26 : vector<16x1xf32>
    %28 = tpu.concatenate %11, %0 in 1 : vector<16x32xf32>, vector<16x8xf32> -> vector<16x40xf32>
    %29 = vector.broadcast %27 : vector<16x1xf32> to vector<16x40xf32>
    %30 = arith.mulf %29, %28 : vector<16x40xf32>
    %31 = arith.truncf %30 : vector<16x40xf32> to vector<16x40xbf16>
    %cst_24 = arith.constant dense<0.000000e+00> : vector<16x40xf32>
    %32 = tpu.matmul %22, %31, %cst_24 {dimension_numbers = #tpu.dot_dimension_numbers<[1], [0], [0], [1], [0, 0, 1, 1], [], []>} : vector<16x16xbf16>, vector<16x40xbf16>, vector<16x40xf32> -> vector<16x40xf32>
    %33 = vector.broadcast %27 : vector<16x1xf32> to vector<16x40xf32>
    %34 = arith.mulf %33, %32 : vector<16x40xf32>
    %35 = vector.extract_strided_slice %34 {offsets = [0, 0], sizes = [16, 32], strides = [1, 1]} : vector<16x40xf32> to vector<16x32xf32>
    %c0_25 = arith.constant 0 : index
    %c0_26 = arith.constant 0 : index
    %36 = vector.load %arg6[%c0_25, %c0_26] : memref<32x32xf32, #tpu.memory_space<vmem>>, vector<32x32xf32>
    %cst_27 = arith.constant dense<0.000000e+00> : vector<16x32xf32>
    %37 = tpu.matmul %35, %36, %cst_27 {dimension_numbers = #tpu.dot_dimension_numbers<[1], [0], [0], [1], [0, 0, 1, 1], [], []>} : vector<16x32xf32>, vector<32x32xf32>, vector<16x32xf32> -> vector<16x32xf32>
    %cst_28 = arith.constant 0.000000e+00 : f32
    %38 = vector.broadcast %cst_28 : f32 to vector<16x32xf32>
    %39 = arith.maximumf %37, %38 : vector<16x32xf32>
    %40 = vector.extract_strided_slice %34 {offsets = [0, 32], sizes = [16, 8], strides = [1, 1]} : vector<16x40xf32> to vector<16x8xf32>
    %c0_29 = arith.constant 0 : index
    %c0_30 = arith.constant 0 : index
    %41 = vector.load %arg7[%c0_29, %c0_30] : memref<8x32xf32, #tpu.memory_space<vmem>>, vector<8x32xf32>
    %cst_31 = arith.constant dense<0.000000e+00> : vector<16x32xf32>
    %42 = tpu.matmul %40, %41, %cst_31 {dimension_numbers = #tpu.dot_dimension_numbers<[1], [0], [0], [1], [0, 0, 1, 1], [], []>} : vector<16x8xf32>, vector<8x32xf32>, vector<16x32xf32> -> vector<16x32xf32>
    %cst_32 = arith.constant 0.000000e+00 : f32
    %43 = vector.broadcast %cst_32 : f32 to vector<16x32xf32>
    %44 = arith.maximumf %42, %43 : vector<16x32xf32>
    %45 = arith.addf %39, %44 : vector<16x32xf32>
    %c0_33 = arith.constant 0 : index
    %c0_34 = arith.constant 0 : index
    %46 = vector.load %arg8[%c0_33, %c0_34] : memref<32x32xf32, #tpu.memory_space<vmem>>, vector<32x32xf32>
    %cst_35 = arith.constant dense<0.000000e+00> : vector<16x32xf32>
    %47 = tpu.matmul %45, %46, %cst_35 {dimension_numbers = #tpu.dot_dimension_numbers<[1], [0], [0], [1], [0, 0, 1, 1], [], []>} : vector<16x32xf32>, vector<32x32xf32>, vector<16x32xf32> -> vector<16x32xf32>
    %48 = vector.broadcast %27 : vector<16x1xf32> to vector<16x32xf32>
    %49 = arith.mulf %48, %47 : vector<16x32xf32>
    %50 = arith.truncf %49 : vector<16x32xf32> to vector<16x32xbf16>
    %cst_36 = arith.constant dense<0.000000e+00> : vector<16x32xf32>
    %51 = tpu.matmul %22, %50, %cst_36 {dimension_numbers = #tpu.dot_dimension_numbers<[1], [0], [0], [1], [0, 0, 1, 1], [], []>} : vector<16x16xbf16>, vector<16x32xbf16>, vector<16x32xf32> -> vector<16x32xf32>
    %52 = vector.broadcast %27 : vector<16x1xf32> to vector<16x32xf32>
    %53 = arith.mulf %52, %51 : vector<16x32xf32>
    %cst_37 = arith.constant 5.000000e-01 : f32
    %54 = vector.broadcast %cst_37 : f32 to vector<16x32xf32>
    %55 = arith.mulf %54, %11 : vector<16x32xf32>
    %cst_38 = arith.constant 5.000000e-01 : f32
    %56 = vector.broadcast %cst_38 : f32 to vector<16x32xf32>
    %57 = arith.mulf %56, %53 : vector<16x32xf32>
    %58 = arith.addf %55, %57 : vector<16x32xf32>
    %59 = arith.truncf %58 : vector<16x32xf32> to vector<16x32xbf16>
    "tpu.trace_start"() <{level = 10 : i32, message = "id,jd->ij"}> : () -> ()
    %cst_39 = arith.constant dense<0.000000e+00> : vector<16x16xf32>
    %60 = tpu.matmul %59, %59, %cst_39 {dimension_numbers = #tpu.dot_dimension_numbers<[1], [1], [0], [0], [0, 0, 1, 0], [], []>} : vector<16x32xbf16>, vector<16x32xbf16>, vector<16x16xf32> -> vector<16x16xf32>
    "tpu.trace_stop"() : () -> ()
    %c0_40 = arith.constant 0 : index
    %c0_41 = arith.constant 0 : index
    %61 = vector.load %arg9[%c0_40, %c0_41] : memref<16x16xf32, #tpu.memory_space<vmem>>, vector<16x16xf32>
    tpu.vector_store %arg9[%c0_40, %c0_41], %60 {strides = array<i32>} : memref<16x16xf32, #tpu.memory_space<vmem>>, vector<16x16xf32>,
    return
  }
}

</mosaic_0001>

<llo_original>
// kernel: tpu_custom_call.1
$region0: #{tpu_custom_call.1}
  #allocation0 [shape = 'u32[]', space=smem, size = 0x4, offset = 0x4, fixed_abs, tag = 'smem constant byte address 0x4 - core index']
  #allocation1 [shape = 'u32[144,128]{1,0:T(1,128)}', space=vmem, size = 0x12000, scoped, tag = 'internal scratch']
  %s0 = inlined_call_operand.vmem [shape: f32[16,8], index: 0, kind: input, shape index: {}]
  %s1 = inlined_call_operand.hbm [shape: bf16[16,16], index: 1, kind: input, shape index: {}]
  %s2 = inlined_call_operand.hbm [shape: f32[16,16], index: 2, kind: input, shape index: {}]
  %s3 = inlined_call_operand.hbm [shape: f32[8,32], index: 3, kind: input, shape index: {}]
  %s4 = inlined_call_operand.hbm [shape: f32[32,32], index: 4, kind: input, shape index: {}]
  %s5 = inlined_call_operand.vmem [shape: f32[32,32], index: 5, kind: input, shape index: {}]
  %s6 = inlined_call_operand.hbm [shape: f32[32,32], index: 6, kind: input, shape index: {}]
  %s7 = inlined_call_operand.hbm [shape: f32[8,32], index: 7, kind: input, shape index: {}]
  %s8 = inlined_call_operand.hbm [shape: f32[32,32], index: 8, kind: input, shape index: {}]
  %s9 = inlined_call_operand.hbm [shape: f32[16,16], index: 9, kind: output, shape index: {0}]
  %s10 = inlined_call_operand.hbm [shape: f32[16,32], index: 10, kind: output, shape index: {1}]
  %s11 = inlined_call_operand.hbm [shape: f32[16,32], index: 11, kind: output, shape index: {2}]
  %12 = xla_tuple %s9, %s10, %s11
  %s13 = sld [smem:[#allocation0]]
  $region90: #{tpu_custom_call.1} parent=0
    _
  %s15 = ssub.s32 1, %s13
  %s16 = scalar_select 0, %s15, %s13
  $region1: #{tpu_custom_call.1} parent=0
    #allocation2 [shape = 'u8[4096]{0}', space=vmem, size = 0x1000, scoped, tag = 'input window, operand 1, single buffered']
    #allocation3 [shape = 's32[1]{0}', space=sflag, size = 0x4, scoped, tag = 'scoped memory for tpu_custom_call.1']
    #allocation4 [shape = 's32[1]{0}', space=sflag, size = 0x4, scoped, tag = 'scoped memory for tpu_custom_call.1']
    #allocation5 [shape = 'u8[8192]{0}', space=vmem, size = 0x2000, scoped, tag = 'input window, operand 2, single buffered']
    #allocation6 [shape = 's32[1]{0}', space=sflag, size = 0x4, scoped, tag = 'scoped memory for tpu_custom_call.1']
    #allocation7 [shape = 'u8[4096]{0}', space=vmem, size = 0x1000, scoped, tag = 'input window, operand 3, single buffered']
    #allocation8 [shape = 'u8[16384]{0}', space=vmem, size = 0x4000, scoped, tag = 'input window, operand 4, single buffered']
    #allocation9 [shape = 's32[1]{0}', space=sflag, size = 0x4, scoped, tag = 'scoped memory for tpu_custom_call.1']
    #allocation10 [shape = 'u8[16384]{0}', space=vmem, size = 0x4000, scoped, tag = 'input window, operand 6, single buffered']
    #allocation11 [shape = 'u8[4096]{0}', space=vmem, size = 0x1000, scoped, tag = 'input window, operand 7, single buffered']
    #allocation12 [shape = 's32[1]{0}', space=sflag, size = 0x4, scoped, tag = 'scoped memory for tpu_custom_call.1']
    #allocation13 [shape = 'u8[16384]{0}', space=vmem, size = 0x4000, scoped, tag = 'input window, operand 8, single buffered']
    #allocation14 [shape = 'u8[8192]{0}', space=vmem, size = 0x2000, scoped, tag = 'output window, operand 0, single buffered']
    #allocation15 [shape = 'u8[8192]{0}', space=vmem, size = 0x2000, scoped, tag = 'output window, operand 1, single buffered']
    #allocation16 [shape = 's32[1]{0}', space=sflag, size = 0x4, scoped, tag = 'scoped memory for tpu_custom_call.1']
    #allocation17 [shape = 'u8[8192]{0}', space=vmem, size = 0x2000, scoped, tag = 'output window, operand 2, single buffered']
    %17 = vsyncpa [#allocation3], 0
    %18 = vsyncpa [#allocation6], 0
    %19 = vsyncpa [#allocation9], 0
    %20 = vsyncpa [#allocation12], 0
    %21 = vsyncpa [#allocation4], 0
    %22 = vsyncpa [#allocation16], 0
    // Predicated region
    $region2: #{tpu_custom_call.1} parent=1 // pred_check
      _
    $region3: #{tpu_custom_call.1} parent=1 // pred_check_branch
      %24 = sbr.rel (0) target = $region5
    $region4: #{tpu_custom_call.1} parent=1 // pred_region
      _
    $region5: #{tpu_custom_call.1} parent=1 // pred_fallthru
      _
    // Predicated region
    $region6: #{tpu_custom_call.1} parent=1 // pred_check
      _
    $region7: #{tpu_custom_call.1} parent=1 // pred_check_branch
      %26 = sbr.rel (0) target = $region9
    $region8: #{tpu_custom_call.1} parent=1 // pred_region
      %s28 = ssub.s32 128, 128
      %29 = vsyncadd [#allocation3], %s28
      %s30 = sshll.u32 [#allocation2], 4
      %s31 = int_to_ptr.vmem [resolvable:$true] %s30
      %36 = dma.hbm_to_vmem [thread:$0]  %s1, 128, %s31, [#allocation3], 64, 64, 4
    $region9: #{tpu_custom_call.1} parent=1 // pred_fallthru
      _
    // Predicated region
    $region10: #{tpu_custom_call.1} parent=1 // pred_check
      _
    $region11: #{tpu_custom_call.1} parent=1 // pred_check_branch
      %38 = sbr.rel (0) target = $region13
    $region12: #{tpu_custom_call.1} parent=1 // pred_region
      %s40 = ssub.s32 256, 256
      %41 = vsyncadd [#allocation6], %s40
      %s42 = sshll.u32 [#allocation5], 4
      %s43 = int_to_ptr.vmem [resolvable:$true] %s42
      %48 = dma.hbm_to_vmem [thread:$0]  %s2, 256, %s43, [#allocation6], 128, 128, 8
    $region13: #{tpu_custom_call.1} parent=1 // pred_fallthru
      _
    // Predicated region
    $region14: #{tpu_custom_call.1} parent=1 // pred_check
      _
    $region15: #{tpu_custom_call.1} parent=1 // pred_check_branch
      %50 = sbr.rel (0) target = $region17
    $region16: #{tpu_custom_call.1} parent=1 // pred_region
      %s52 = ssub.s32 128, 128
      %53 = vsyncadd [#allocation6], %s52
      %s55 = sshll.u32 [#allocation7], 4
      %s56 = int_to_ptr.vmem [resolvable:$true] %s55
      %58 = dma.hbm_to_vmem [thread:$0]  %s3, 128, %s56, [#allocation6]
    $region17: #{tpu_custom_call.1} parent=1 // pred_fallthru
      _
    // Predicated region
    $region18: #{tpu_custom_call.1} parent=1 // pred_check
      _
    $region19: #{tpu_custom_call.1} parent=1 // pred_check_branch
      %60 = sbr.rel (0) target = $region21
    $region20: #{tpu_custom_call.1} parent=1 // pred_region
      %s62 = ssub.s32 512, 512
      %63 = vsyncadd [#allocation9], %s62
      %s64 = sshll.u32 [#allocation8], 4
      %s65 = int_to_ptr.vmem [resolvable:$true] %s64
      %70 = dma.hbm_to_vmem [thread:$0]  %s4, 512, %s65, [#allocation9], 128, 128, 8
    $region21: #{tpu_custom_call.1} parent=1 // pred_fallthru
      _
    // Predicated region
    $region22: #{tpu_custom_call.1} parent=1 // pred_check
      _
    $region23: #{tpu_custom_call.1} parent=1 // pred_check_branch
      %72 = sbr.rel (0) target = $region25
    $region24: #{tpu_custom_call.1} parent=1 // pred_region
      _
    $region25: #{tpu_custom_call.1} parent=1 // pred_fallthru
      _
    // Predicated region
    $region26: #{tpu_custom_call.1} parent=1 // pred_check
      _
    $region27: #{tpu_custom_call.1} parent=1 // pred_check_branch
      %74 = sbr.rel (0) target = $region29
    $region28: #{tpu_custom_call.1} parent=1 // pred_region
      %s76 = ssub.s32 512, 512
      %77 = vsyncadd [#allocation9], %s76
      %s78 = sshll.u32 [#allocation10], 4
      %s79 = int_to_ptr.vmem [resolvable:$true] %s78
      %84 = dma.hbm_to_vmem [thread:$0]  %s6, 512, %s79, [#allocation9], 128, 128, 8
    $region29: #{tpu_custom_call.1} parent=1 // pred_fallthru
      _
    // Predicated region
    $region30: #{tpu_custom_call.1} parent=1 // pred_check
      _
    $region31: #{tpu_custom_call.1} parent=1 // pred_check_branch
      %86 = sbr.rel (0) target = $region33
    $region32: #{tpu_custom_call.1} parent=1 // pred_region
      %s88 = ssub.s32 128, 128
      %89 = vsyncadd [#allocation12], %s88
      %s91 = sshll.u32 [#allocation11], 4
      %s92 = int_to_ptr.vmem [resolvable:$true] %s91
      %94 = dma.hbm_to_vmem [thread:$0]  %s7, 128, %s92, [#allocation12]
    $region33: #{tpu_custom_call.1} parent=1 // pred_fallthru
      _
    // Predicated region
    $region34: #{tpu_custom_call.1} parent=1 // pred_check
      _
    $region35: #{tpu_custom_call.1} parent=1 // pred_check_branch
      %96 = sbr.rel (0) target = $region37
    $region36: #{tpu_custom_call.1} parent=1 // pred_region
      %s98 = ssub.s32 512, 512
      %99 = vsyncadd [#allocation12], %s98
      %s100 = sshll.u32 [#allocation13], 4
      %s101 = int_to_ptr.vmem [resolvable:$true] %s100
      %106 = dma.hbm_to_vmem [thread:$0]  %s8, 512, %s101, [#allocation12], 128, 128, 8
    $region37: #{tpu_custom_call.1} parent=1 // pred_fallthru
      _
    // Predicated region
    $region38: #{tpu_custom_call.1} parent=1 // pred_check
      _
    $region39: #{tpu_custom_call.1} parent=1 // pred_check_branch
      %108 = sbr.rel (0) target = $region41
    $region40: #{tpu_custom_call.1} parent=1 // pred_region
      %109 = dma.done [#allocation3], 128
    $region41: #{tpu_custom_call.1} parent=1 // pred_fallthru
      _
    // Predicated region
    $region42: #{tpu_custom_call.1} parent=1 // pred_check
      _
    $region43: #{tpu_custom_call.1} parent=1 // pred_check_branch
      %111 = sbr.rel (0) target = $region45
    $region44: #{tpu_custom_call.1} parent=1 // pred_region
      %112 = dma.done [#allocation6], 256
    $region45: #{tpu_custom_call.1} parent=1 // pred_fallthru
      _
    // Predicated region
    $region46: #{tpu_custom_call.1} parent=1 // pred_check
      _
    $region47: #{tpu_custom_call.1} parent=1 // pred_check_branch
      %114 = sbr.rel (0) target = $region49
    $region48: #{tpu_custom_call.1} parent=1 // pred_region
      %115 = dma.done [#allocation6], 128
    $region49: #{tpu_custom_call.1} parent=1 // pred_fallthru
      _
    // Predicated region
    $region50: #{tpu_custom_call.1} parent=1 // pred_check
      _
    $region51: #{tpu_custom_call.1} parent=1 // pred_check_branch
      %117 = sbr.rel (0) target = $region53
    $region52: #{tpu_custom_call.1} parent=1 // pred_region
      %118 = dma.done [#allocation9], 512
    $region53: #{tpu_custom_call.1} parent=1 // pred_fallthru
      _
    // Predicated region
    $region54: #{tpu_custom_call.1} parent=1 // pred_check
      _
    $region55: #{tpu_custom_call.1} parent=1 // pred_check_branch
      %120 = sbr.rel (0) target = $region57
    $region56: #{tpu_custom_call.1} parent=1 // pred_region
      %121 = dma.done [#allocation9], 512
    $region57: #{tpu_custom_call.1} parent=1 // pred_fallthru
      _
    // Predicated region
    $region58: #{tpu_custom_call.1} parent=1 // pred_check
      _
    $region59: #{tpu_custom_call.1} parent=1 // pred_check_branch
      %123 = sbr.rel (0) target = $region61
    $region60: #{tpu_custom_call.1} parent=1 // pred_region
      %124 = dma.done [#allocation12], 128
    $region61: #{tpu_custom_call.1} parent=1 // pred_fallthru
      _
    // Predicated region
    $region62: #{tpu_custom_call.1} parent=1 // pred_check
      _
    $region63: #{tpu_custom_call.1} parent=1 // pred_check_branch
      %126 = sbr.rel (0) target = $region65
    $region64: #{tpu_custom_call.1} parent=1 // pred_region
      %127 = dma.done [#allocation12], 512
    $region65: #{tpu_custom_call.1} parent=1 // pred_fallthru
      _
    %v130 = vld [vmem:[%s0] sm:$0xff]
    %v131 = vld [vmem:[%s0 + $0x8] sm:$0xff]
    %v132 = vld [vmem:[#allocation2] sm:$0xf]
    %v133 = vld [vmem:[#allocation2 + $0x4] sm:$0xf]
    %v134 = vpack.c.bf16 %v131, %v130
    %v137 = vunpack.c.l.b16 %v132
    %v138 = vunpack.c.l.b16 %v133
    %v139 = vpack.c.b16 %v138, %v137
    %vm140 = vcmask 130048
    %v142 = vsel %vm140, %v139, 0
    %144 = vmatprep.subr.bf16.mxu0 0
    %145 = vmatpush1.bf16.msra.mxu0 0
    %146 = vmatprep.subr.bf16.mxu0 0
    %147 = vmatpush1.bf16.msra.mxu0 0
    %148 = vmatprep.subr.bf16.mxu0 0
    %149 = vmatpush1.bf16.msra.mxu0 0
    %150 = vmatprep.subr.bf16.mxu0 0
    %151 = vmatpush1.bf16.msra.mxu0 0
    %152 = vmatprep.subr.bf16.mxu0 0
    %153 = vmatpush1.bf16.msra.mxu0 0
    %154 = vmatprep.subr.bf16.mxu0 0
    %155 = vmatpush1.bf16.msra.mxu0 0
    %156 = vmatprep.subr.bf16.mxu0 0
    %157 = vmatpush1.bf16.msra.mxu0 0
    %158 = vmatprep.subr.bf16.mxu0 0
    %159 = vmatpush1.bf16.msra.mxu0 %v134
    %160 = vmatprep.subr.bf16.mxu0 0
    %161 = vmatpush2.bf16.msra.mxu0 0
    %162 = vmatprep.subr.bf16.mxu0 0
    %163 = vmatpush2.bf16.msra.mxu0 0
    %164 = vmatprep.subr.bf16.mxu0 0
    %165 = vmatpush2.bf16.msra.mxu0 0
    %166 = vmatprep.subr.bf16.mxu0 0
    %167 = vmatpush2.bf16.msra.mxu0 0
    %168 = vmatprep.subr.bf16.mxu0 0
    %169 = vmatpush2.bf16.msra.mxu0 0
    %170 = vmatprep.subr.bf16.mxu0 0
    %171 = vmatpush2.bf16.msra.mxu0 0
    %172 = vmatprep.subr.bf16.mxu0 0
    %173 = vmatpush2.bf16.msra.mxu0 0
    %174 = vmatprep.subr.bf16.mxu0 0
    %175 = vmatpush2.bf16.msra.mxu0 0
    %176 = vmatprep.mubr.bf16.mxu0 0
    %177 = vmatmul.mubr.bf16.gmra.mxu0 %v142
    %v178 = vpop.f32.mrf.mxu0
    %v179 = vadd.f32 0.0, %v178
    %v180 = vpop.f32.mrf.mxu0
    %v181 = vpop.f32.mrf.mxu0
    %v182 = vadd.f32 0.0, %v181
    %v183 = vpop.f32.mrf.mxu0
    %184 = vdwg.mxu0
    %v185 = vld [vmem:[#allocation7] sm:$0xff]
    %vm186 = vcmask 64512
    %v188 = vsel %vm186, %v179, 0
    %v191 = vsel %vm186, %v182, 0
    %193 = vmatprep.subr.mxu0 0.0
    %194 = vmatpush1.msra.mxu0 0.0
    %195 = vmatprep.subr.mxu0 0.0
    %196 = vmatpush1.msra.mxu0 0.0
    %197 = vmatprep.subr.mxu0 0.0
    %198 = vmatpush1.msra.mxu0 0.0
    %199 = vmatprep.subr.mxu0 0.0
    %200 = vmatpush1.msra.mxu0 0.0
    %201 = vmatprep.subr.mxu0 0.0
    %202 = vmatpush1.msra.mxu0 0.0
    %203 = vmatprep.subr.mxu0 0.0
    %204 = vmatpush1.msra.mxu0 0.0
    %205 = vmatprep.subr.mxu0 0.0
    %206 = vmatpush1.msra.mxu0 0.0
    %207 = vmatprep.subr.mxu0 0.0
    %208 = vmatpush1.msra.mxu0 0.0
    %209 = vmatprep.subr.mxu0 0.0
    %210 = vmatpush1.msra.mxu0 0.0
    %211 = vmatprep.subr.mxu0 0.0
    %212 = vmatpush1.msra.mxu0 0.0
    %213 = vmatprep.subr.mxu0 0.0
    %214 = vmatpush1.msra.mxu0 0.0
    %215 = vmatprep.subr.mxu0 0.0
    %216 = vmatpush1.msra.mxu0 0.0
    %217 = vmatprep.subr.mxu0 0.0
    %218 = vmatpush1.msra.mxu0 0.0
    %219 = vmatprep.subr.mxu0 0.0
    %220 = vmatpush1.msra.mxu0 0.0
    %221 = vmatprep.subr.mxu0 0.0
    %222 = vmatpush1.msra.mxu0 0.0
    %223 = vmatprep.subr.mxu0 0.0
    %224 = vmatpush1.msra.mxu0 %v185
    %225 = vmatprep.subr.mxu0 0.0
    %226 = vmatpush2.msra.mxu0 0.0
    %227 = vmatprep.subr.mxu0 0.0
    %228 = vmatpush2.msra.mxu0 0.0
    %229 = vmatprep.subr.mxu0 0.0
    %230 = vmatpush2.msra.mxu0 0.0
    %231 = vmatprep.subr.mxu0 0.0
    %232 = vmatpush2.msra.mxu0 0.0
    %233 = vmatprep.subr.mxu0 0.0
    %234 = vmatpush2.msra.mxu0 0.0
    %235 = vmatprep.subr.mxu0 0.0
    %236 = vmatpush2.msra.mxu0 0.0
    %237 = vmatprep.subr.mxu0 0.0
    %238 = vmatpush2.msra.mxu0 0.0
    %239 = vmatprep.subr.mxu0 0.0
    %240 = vmatpush2.msra.mxu0 0.0
    %241 = vmatprep.subr.mxu0 0.0
    %242 = vmatpush2.msra.mxu0 0.0
    %243 = vmatprep.subr.mxu0 0.0
    %244 = vmatpush2.msra.mxu0 0.0
    %245 = vmatprep.subr.mxu0 0.0
    %246 = vmatpush2.msra.mxu0 0.0
    %247 = vmatprep.subr.mxu0 0.0
    %248 = vmatpush2.msra.mxu0 0.0
    %249 = vmatprep.subr.mxu0 0.0
    %250 = vmatpush2.msra.mxu0 0.0
    %251 = vmatprep.subr.mxu0 0.0
    %252 = vmatpush2.msra.mxu0 0.0
    %253 = vmatprep.subr.mxu0 0.0
    %254 = vmatpush2.msra.mxu0 0.0
    %255 = vmatprep.subr.mxu0 0.0
    %256 = vmatpush2.msra.mxu0 0.0
    %257 = vmatprep.mubr.f32.mxu0 0.0
    %258 = vmatmul.mubr.f32.gmra.mxu0 %v188
    %v259 = vpop.f32.mrf.mxu0
    %v260 = vadd.f32 0.0, %v259
    %v261 = vpop.f32.mrf.mxu0
    %262 = vmatprep.mubr.f32.mxu0 0.0
    %263 = vmatmul.mubr.f32.gmra.mxu0 %v191
    %v264 = vpop.f32.mrf.mxu0
    %v265 = vadd.f32 0.0, %v264
    %v266 = vpop.f32.mrf.mxu0
    %267 = vdwg.mxu0
    %v268 = vmax.f32 %v260, 0.0
    %v269 = vmax.f32 %v265, 0.0
    %v270 = vpack.c.bf16 %v269, %v268
    %271 = vmatprep.subr.bf16.mxu0 0
    %272 = vmatpush1.bf16.msra.mxu0 0
    %273 = vmatprep.subr.bf16.mxu0 0
    %274 = vmatpush1.bf16.msra.mxu0 0
    %275 = vmatprep.subr.bf16.mxu0 0
    %276 = vmatpush1.bf16.msra.mxu0 0
    %277 = vmatprep.subr.bf16.mxu0 0
    %278 = vmatpush1.bf16.msra.mxu0 0
    %279 = vmatprep.subr.bf16.mxu0 0
    %280 = vmatpush1.bf16.msra.mxu0 0
    %281 = vmatprep.subr.bf16.mxu0 0
    %282 = vmatpush1.bf16.msra.mxu0 0
    %283 = vmatprep.subr.bf16.mxu0 0
    %284 = vmatpush1.bf16.msra.mxu0 0
    %285 = vmatprep.subr.bf16.mxu0 0
    %286 = vmatpush1.bf16.msra.mxu0 %v270
    %287 = vmatprep.subr.bf16.mxu0 0
    %288 = vmatpush2.bf16.msra.mxu0 0
    %289 = vmatprep.subr.bf16.mxu0 0
    %290 = vmatpush2.bf16.msra.mxu0 0
    %291 = vmatprep.subr.bf16.mxu0 0
    %292 = vmatpush2.bf16.msra.mxu0 0
    %293 = vmatprep.subr.bf16.mxu0 0
    %294 = vmatpush2.bf16.msra.mxu0 0
    %295 = vmatprep.subr.bf16.mxu0 0
    %296 = vmatpush2.bf16.msra.mxu0 0
    %297 = vmatprep.subr.bf16.mxu0 0
    %298 = vmatpush2.bf16.msra.mxu0 0
    %299 = vmatprep.subr.bf16.mxu0 0
    %300 = vmatpush2.bf16.msra.mxu0 0
    %301 = vmatprep.subr.bf16.mxu0 0
    %302 = vmatpush2.bf16.msra.mxu0 0
    %303 = vmatprep.mubr.bf16.mxu0 0
    %304 = vmatmul.mubr.bf16.gmra.mxu0 %v142
    %v305 = vpop.f32.mrf.mxu0
    %v306 = vadd.f32 0.0, %v305
    %v307 = vpop.f32.mrf.mxu0
    %v308 = vpop.f32.mrf.mxu0
    %v309 = vadd.f32 0.0, %v308
    %v310 = vpop.f32.mrf.mxu0
    %311 = vdwg.mxu0
    %v312 = vld [vmem:[#allocation8] sm:$0xff]
    %v313 = vld [vmem:[#allocation8 + $0x8] sm:$0xff]
    %v314 = vld [vmem:[#allocation8 + $0x10] sm:$0xff]
    %v315 = vld [vmem:[#allocation8 + $0x18] sm:$0xff]
    %vm316 = vcmask 261120
    %v318 = vsel %vm316, %v306, 0
    %v321 = vsel %vm316, %v309, 0
    %323 = vmatprep.subr.mxu0 0.0
    %324 = vmatpush1.msra.mxu0 0.0
    %325 = vmatprep.subr.mxu0 0.0
    %326 = vmatpush1.msra.mxu0 0.0
    %327 = vmatprep.subr.mxu0 0.0
    %328 = vmatpush1.msra.mxu0 0.0
    %329 = vmatprep.subr.mxu0 0.0
    %330 = vmatpush1.msra.mxu0 0.0
    %331 = vmatprep.subr.mxu0 0.0
    %332 = vmatpush1.msra.mxu0 0.0
    %333 = vmatprep.subr.mxu0 0.0
    %334 = vmatpush1.msra.mxu0 0.0
    %335 = vmatprep.subr.mxu0 0.0
    %336 = vmatpush1.msra.mxu0 0.0
    %337 = vmatprep.subr.mxu0 0.0
    %338 = vmatpush1.msra.mxu0 0.0
    %339 = vmatprep.subr.mxu0 0.0
    %340 = vmatpush1.msra.mxu0 0.0
    %341 = vmatprep.subr.mxu0 0.0
    %342 = vmatpush1.msra.mxu0 0.0
    %343 = vmatprep.subr.mxu0 0.0
    %344 = vmatpush1.msra.mxu0 0.0
    %345 = vmatprep.subr.mxu0 0.0
    %346 = vmatpush1.msra.mxu0 0.0
    %347 = vmatprep.subr.mxu0 0.0
    %348 = vmatpush1.msra.mxu0 %v315
    %349 = vmatprep.subr.mxu0 0.0
    %350 = vmatpush1.msra.mxu0 %v314
    %351 = vmatprep.subr.mxu0 0.0
    %352 = vmatpush1.msra.mxu0 %v313
    %353 = vmatprep.subr.mxu0 0.0
    %354 = vmatpush1.msra.mxu0 %v312
    %355 = vmatprep.subr.mxu0 0.0
    %356 = vmatpush2.msra.mxu0 0.0
    %357 = vmatprep.subr.mxu0 0.0
    %358 = vmatpush2.msra.mxu0 0.0
    %359 = vmatprep.subr.mxu0 0.0
    %360 = vmatpush2.msra.mxu0 0.0
    %361 = vmatprep.subr.mxu0 0.0
    %362 = vmatpush2.msra.mxu0 0.0
    %363 = vmatprep.subr.mxu0 0.0
    %364 = vmatpush2.msra.mxu0 0.0
    %365 = vmatprep.subr.mxu0 0.0
    %366 = vmatpush2.msra.mxu0 0.0
    %367 = vmatprep.subr.mxu0 0.0
    %368 = vmatpush2.msra.mxu0 0.0
    %369 = vmatprep.subr.mxu0 0.0
    %370 = vmatpush2.msra.mxu0 0.0
    %371 = vmatprep.subr.mxu0 0.0
    %372 = vmatpush2.msra.mxu0 0.0
    %373 = vmatprep.subr.mxu0 0.0
    %374 = vmatpush2.msra.mxu0 0.0
    %375 = vmatprep.subr.mxu0 0.0
    %376 = vmatpush2.msra.mxu0 0.0
    %377 = vmatprep.subr.mxu0 0.0
    %378 = vmatpush2.msra.mxu0 0.0
    %379 = vmatprep.subr.mxu0 0.0
    %380 = vmatpush2.msra.mxu0 0.0
    %381 = vmatprep.subr.mxu0 0.0
    %382 = vmatpush2.msra.mxu0 0.0
    %383 = vmatprep.subr.mxu0 0.0
    %384 = vmatpush2.msra.mxu0 0.0
    %385 = vmatprep.subr.mxu0 0.0
    %386 = vmatpush2.msra.mxu0 0.0
    %387 = vmatprep.mubr.f32.mxu0 0.0
    %388 = vmatmul.mubr.f32.gmra.mxu0 %v318
    %v389 = vpop.f32.mrf.mxu0
    %v390 = vadd.f32 0.0, %v389
    %v391 = vpop.f32.mrf.mxu0
    %392 = vmatprep.mubr.f32.mxu0 0.0
    %393 = vmatmul.mubr.f32.gmra.mxu0 %v321
    %v394 = vpop.f32.mrf.mxu0
    %v395 = vadd.f32 0.0, %v394
    %v396 = vpop.f32.mrf.mxu0
    %397 = vdwg.mxu0
    %v398 = vld [vmem:[%s5] sm:$0xff]
    %v399 = vld [vmem:[%s5 + $0x8] sm:$0xff]
    %v400 = vld [vmem:[%s5 + $0x10] sm:$0xff]
    %v401 = vld [vmem:[%s5 + $0x18] sm:$0xff]
    %402 = vmatprep.subr.mxu0 0.0
    %403 = vmatpush1.msra.mxu0 0.0
    %404 = vmatprep.subr.mxu0 0.0
    %405 = vmatpush1.msra.mxu0 0.0
    %406 = vmatprep.subr.mxu0 0.0
    %407 = vmatpush1.msra.mxu0 0.0
    %408 = vmatprep.subr.mxu0 0.0
    %409 = vmatpush1.msra.mxu0 0.0
    %410 = vmatprep.subr.mxu0 0.0
    %411 = vmatpush1.msra.mxu0 0.0
    %412 = vmatprep.subr.mxu0 0.0
    %413 = vmatpush1.msra.mxu0 0.0
    %414 = vmatprep.subr.mxu0 0.0
    %415 = vmatpush1.msra.mxu0 0.0
    %416 = vmatprep.subr.mxu0 0.0
    %417 = vmatpush1.msra.mxu0 0.0
    %418 = vmatprep.subr.mxu0 0.0
    %419 = vmatpush1.msra.mxu0 0.0
    %420 = vmatprep.subr.mxu0 0.0
    %421 = vmatpush1.msra.mxu0 0.0
    %422 = vmatprep.subr.mxu0 0.0
    %423 = vmatpush1.msra.mxu0 0.0
    %424 = vmatprep.subr.mxu0 0.0
    %425 = vmatpush1.msra.mxu0 0.0
    %426 = vmatprep.subr.mxu0 0.0
    %427 = vmatpush1.msra.mxu0 %v401
    %428 = vmatprep.subr.mxu0 0.0
    %429 = vmatpush1.msra.mxu0 %v400
    %430 = vmatprep.subr.mxu0 0.0
    %431 = vmatpush1.msra.mxu0 %v399
    %432 = vmatprep.subr.mxu0 0.0
    %433 = vmatpush1.msra.mxu0 %v398
    %434 = vmatprep.subr.mxu0 0.0
    %435 = vmatpush2.msra.mxu0 0.0
    %436 = vmatprep.subr.mxu0 0.0
    %437 = vmatpush2.msra.mxu0 0.0
    %438 = vmatprep.subr.mxu0 0.0
    %439 = vmatpush2.msra.mxu0 0.0
    %440 = vmatprep.subr.mxu0 0.0
    %441 = vmatpush2.msra.mxu0 0.0
    %442 = vmatprep.subr.mxu0 0.0
    %443 = vmatpush2.msra.mxu0 0.0
    %444 = vmatprep.subr.mxu0 0.0
    %445 = vmatpush2.msra.mxu0 0.0
    %446 = vmatprep.subr.mxu0 0.0
    %447 = vmatpush2.msra.mxu0 0.0
    %448 = vmatprep.subr.mxu0 0.0
    %449 = vmatpush2.msra.mxu0 0.0
    %450 = vmatprep.subr.mxu0 0.0
    %451 = vmatpush2.msra.mxu0 0.0
    %452 = vmatprep.subr.mxu0 0.0
    %453 = vmatpush2.msra.mxu0 0.0
    %454 = vmatprep.subr.mxu0 0.0
    %455 = vmatpush2.msra.mxu0 0.0
    %456 = vmatprep.subr.mxu0 0.0
    %457 = vmatpush2.msra.mxu0 0.0
    %458 = vmatprep.subr.mxu0 0.0
    %459 = vmatpush2.msra.mxu0 0.0
    %460 = vmatprep.subr.mxu0 0.0
    %461 = vmatpush2.msra.mxu0 0.0
    %462 = vmatprep.subr.mxu0 0.0
    %463 = vmatpush2.msra.mxu0 0.0
    %464 = vmatprep.subr.mxu0 0.0
    %465 = vmatpush2.msra.mxu0 0.0
    %466 = vmatprep.mubr.f32.mxu0 0.0
    %467 = vmatmul.mubr.f32.gmra.mxu0 %v318
    %v468 = vpop.f32.mrf.mxu0
    %v469 = vadd.f32 0.0, %v468
    %v470 = vpop.f32.mrf.mxu0
    %471 = vmatprep.mubr.f32.mxu0 0.0
    %472 = vmatmul.mubr.f32.gmra.mxu0 %v321
    %v473 = vpop.f32.mrf.mxu0
    %v474 = vadd.f32 0.0, %v473
    %v475 = vpop.f32.mrf.mxu0
    %476 = vdwg.mxu0
    %477 = vst.msk [vmem:[#allocation15] sm:$0xff] %vm316, %v390
    %478 = vst.msk [vmem:[#allocation15 + $0x8] sm:$0xff] %vm316, %v395
    %479 = vst.msk [vmem:[#allocation17] sm:$0xff] %vm316, %v469
    %480 = vst.msk [vmem:[#allocation17 + $0x8] sm:$0xff] %vm316, %v474
    %v481 = vpack.c.bf16 %v395, %v390
    %v483 = vsel %vm316, %v481, 0
    %485 = vmatprep.subr.bf16.mxu0 0
    %486 = vmatpush1.bf16.xpose.msra.mxu0 0
    %487 = vmatprep.subr.bf16.mxu0 0
    %488 = vmatpush1.bf16.xpose.msra.mxu0 0
    %489 = vmatprep.subr.bf16.mxu0 0
    %490 = vmatpush1.bf16.xpose.msra.mxu0 0
    %491 = vmatprep.subr.bf16.mxu0 0
    %492 = vmatpush1.bf16.xpose.msra.mxu0 0
    %493 = vmatprep.subr.bf16.mxu0 0
    %494 = vmatpush1.bf16.xpose.msra.mxu0 0
    %495 = vmatprep.subr.bf16.mxu0 0
    %496 = vmatpush1.bf16.xpose.msra.mxu0 0
    %497 = vmatprep.subr.bf16.mxu0 0
    %498 = vmatpush1.bf16.xpose.msra.mxu0 0
    %499 = vmatprep.subr.bf16.mxu0 0
    %500 = vmatpush1.bf16.xpose.msra.mxu0 %v483
    %501 = vmatprep.subr.bf16.mxu0 0
    %502 = vmatpush2.bf16.xpose.msra.mxu0 0
    %503 = vmatprep.subr.bf16.mxu0 0
    %504 = vmatpush2.bf16.xpose.msra.mxu0 0
    %505 = vmatprep.subr.bf16.mxu0 0
    %506 = vmatpush2.bf16.xpose.msra.mxu0 0
    %507 = vmatprep.subr.bf16.mxu0 0
    %508 = vmatpush2.bf16.xpose.msra.mxu0 0
    %509 = vmatprep.subr.bf16.mxu0 0
    %510 = vmatpush2.bf16.xpose.msra.mxu0 0
    %511 = vmatprep.subr.bf16.mxu0 0
    %512 = vmatpush2.bf16.xpose.msra.mxu0 0
    %513 = vmatprep.subr.bf16.mxu0 0
    %514 = vmatpush2.bf16.xpose.msra.mxu0 0
    %515 = vmatprep.subr.bf16.mxu0 0
    %516 = vmatpush2.bf16.xpose.msra.mxu0 0
    %517 = vmatprep.mubr.bf16.mxu0 0
    %518 = vmatmul.mubr.bf16.gmra.mxu0 %v483
    %v519 = vpop.f32.mrf.mxu0
    %v520 = vadd.f32 0.0, %v519
    %v521 = vpop.f32.mrf.mxu0
    %v522 = vpop.f32.mrf.mxu0
    %v523 = vadd.f32 0.0, %v522
    %v524 = vpop.f32.mrf.mxu0
    %525 = vdwg.mxu0
    %v526 = vld [vmem:[#allocation5] sm:$0xff]
    %v527 = vld [vmem:[#allocation5 + $0x8] sm:$0xff]
    %vm528 = vcmp.gt.f32.partialorder %v520, %v526
    %vm529 = vcmp.gt.f32.partialorder %v523, %v527
    %v530 = vsel %vm528, 1, 0
    %v531 = vsel %vm529, 1, 0
    %v532 = vcvt.s32.f32 %v530
    %v533 = vcvt.s32.f32 %v531
    %v534 = vpack.c.bf16 %v533, %v532
    %v536 = vsel %vm140, %v534, 0
    %538 = vmatprep.subr.bf16.mxu0 0
    %539 = vmatpush1.bf16.msra.mxu0 0
    %540 = vmatprep.subr.bf16.mxu0 0
    %541 = vmatpush1.bf16.msra.mxu0 0
    %542 = vmatprep.subr.bf16.mxu0 0
    %543 = vmatpush1.bf16.msra.mxu0 0
    %544 = vmatprep.subr.bf16.mxu0 0
    %545 = vmatpush1.bf16.msra.mxu0 0
    %546 = vmatprep.subr.bf16.mxu0 0
    %547 = vmatpush1.bf16.msra.mxu0 0
    %548 = vmatprep.subr.bf16.mxu0 0
    %549 = vmatpush1.bf16.msra.mxu0 0
    %550 = vmatprep.subr.bf16.mxu0 0
    %551 = vmatpush1.bf16.msra.mxu0 0
    %552 = vmatprep.subr.bf16.mxu0 0
    %553 = vmatpush1.bf16.msra.mxu0 1065369472
    %554 = vmatprep.subr.bf16.mxu0 0
    %555 = vmatpush2.bf16.msra.mxu0 0
    %556 = vmatprep.subr.bf16.mxu0 0
    %557 = vmatpush2.bf16.msra.mxu0 0
    %558 = vmatprep.subr.bf16.mxu0 0
    %559 = vmatpush2.bf16.msra.mxu0 0
    %560 = vmatprep.subr.bf16.mxu0 0
    %561 = vmatpush2.bf16.msra.mxu0 0
    %562 = vmatprep.subr.bf16.mxu0 0
    %563 = vmatpush2.bf16.msra.mxu0 0
    %564 = vmatprep.subr.bf16.mxu0 0
    %565 = vmatpush2.bf16.msra.mxu0 0
    %566 = vmatprep.subr.bf16.mxu0 0
    %567 = vmatpush2.bf16.msra.mxu0 0
    %568 = vmatprep.subr.bf16.mxu0 0
    %569 = vmatpush2.bf16.msra.mxu0 0
    %570 = vmatprep.mubr.bf16.mxu0 0
    %571 = vmatmul.mubr.bf16.gmra.mxu0 %v536
    %v572 = vpop.f32.mrf.mxu0
    %v573 = vadd.f32 0.0, %v572
    %v574 = vpop.f32.mrf.mxu0
    %v575 = vpop.f32.mrf.mxu0
    %v576 = vadd.f32 0.0, %v575
    %v577 = vpop.f32.mrf.mxu0
    %578 = vdwg.mxu0
    %v579 = vmax.f32 %v573, 1e-12
    %v580 = vmax.f32 %v576, 1e-12
    %v581 = vrsqrt.pop %v579
    %v582 = vrsqrt.pop %v580
    %585 = vrot.lane.b32.xlu0 %v130, 32
    %v586 = vpop.permute.xlu0 %585
    %587 = vrot.lane.b32.xlu0 %v131, 32
    %v588 = vpop.permute.xlu0 %587
    %v591 = vsel %vm316, %v390, %v586
    %v592 = vsel %vm316, %v395, %v588
    %594 = vset.pattern.permute.xlu0 0
    %595 = vperm.xlu0 %594, %v581
    %v596 = vpop.permute.xlu0 %595
    %599 = vset.pattern.permute.xlu0 0
    %600 = vperm.xlu0 %599, %v582
    %v601 = vpop.permute.xlu0 %600
    %v603 = vmul.f32 %v596, %v591
    %v604 = vmul.f32 %v601, %v592
    %v605 = vpack.c.bf16 %v604, %v603
    %606 = vmatprep.subr.bf16.mxu0 0
    %607 = vmatpush1.bf16.msra.mxu0 0
    %608 = vmatprep.subr.bf16.mxu0 0
    %609 = vmatpush1.bf16.msra.mxu0 0
    %610 = vmatprep.subr.bf16.mxu0 0
    %611 = vmatpush1.bf16.msra.mxu0 0
    %612 = vmatprep.subr.bf16.mxu0 0
    %613 = vmatpush1.bf16.msra.mxu0 0
    %614 = vmatprep.subr.bf16.mxu0 0
    %615 = vmatpush1.bf16.msra.mxu0 0
    %616 = vmatprep.subr.bf16.mxu0 0
    %617 = vmatpush1.bf16.msra.mxu0 0
    %618 = vmatprep.subr.bf16.mxu0 0
    %619 = vmatpush1.bf16.msra.mxu0 0
    %620 = vmatprep.subr.bf16.mxu0 0
    %621 = vmatpush1.bf16.msra.mxu0 %v605
    %622 = vmatprep.subr.bf16.mxu0 0
    %623 = vmatpush2.bf16.msra.mxu0 0
    %624 = vmatprep.subr.bf16.mxu0 0
    %625 = vmatpush2.bf16.msra.mxu0 0
    %626 = vmatprep.subr.bf16.mxu0 0
    %627 = vmatpush2.bf16.msra.mxu0 0
    %628 = vmatprep.subr.bf16.mxu0 0
    %629 = vmatpush2.bf16.msra.mxu0 0
    %630 = vmatprep.subr.bf16.mxu0 0
    %631 = vmatpush2.bf16.msra.mxu0 0
    %632 = vmatprep.subr.bf16.mxu0 0
    %633 = vmatpush2.bf16.msra.mxu0 0
    %634 = vmatprep.subr.bf16.mxu0 0
    %635 = vmatpush2.bf16.msra.mxu0 0
    %636 = vmatprep.subr.bf16.mxu0 0
    %637 = vmatpush2.bf16.msra.mxu0 0
    %638 = vmatprep.mubr.bf16.mxu0 0
    %639 = vmatmul.mubr.bf16.gmra.mxu0 %v536
    %v640 = vpop.f32.mrf.mxu0
    %v641 = vadd.f32 0.0, %v640
    %v642 = vpop.f32.mrf.mxu0
    %v643 = vpop.f32.mrf.mxu0
    %v644 = vadd.f32 0.0, %v643
    %v645 = vpop.f32.mrf.mxu0
    %646 = vdwg.mxu0
    %v647 = vmul.f32 %v596, %v641
    %v648 = vmul.f32 %v601, %v644
    %v649 = vld [vmem:[#allocation10] sm:$0xff]
    %v650 = vld [vmem:[#allocation10 + $0x8] sm:$0xff]
    %v651 = vld [vmem:[#allocation10 + $0x10] sm:$0xff]
    %v652 = vld [vmem:[#allocation10 + $0x18] sm:$0xff]
    %v654 = vsel %vm316, %v647, 0
    %v657 = vsel %vm316, %v648, 0
    %659 = vmatprep.subr.mxu0 0.0
    %660 = vmatpush1.msra.mxu0 0.0
    %661 = vmatprep.subr.mxu0 0.0
    %662 = vmatpush1.msra.mxu0 0.0
    %663 = vmatprep.subr.mxu0 0.0
    %664 = vmatpush1.msra.mxu0 0.0
    %665 = vmatprep.subr.mxu0 0.0
    %666 = vmatpush1.msra.mxu0 0.0
    %667 = vmatprep.subr.mxu0 0.0
    %668 = vmatpush1.msra.mxu0 0.0
    %669 = vmatprep.subr.mxu0 0.0
    %670 = vmatpush1.msra.mxu0 0.0
    %671 = vmatprep.subr.mxu0 0.0
    %672 = vmatpush1.msra.mxu0 0.0
    %673 = vmatprep.subr.mxu0 0.0
    %674 = vmatpush1.msra.mxu0 0.0
    %675 = vmatprep.subr.mxu0 0.0
    %676 = vmatpush1.msra.mxu0 0.0
    %677 = vmatprep.subr.mxu0 0.0
    %678 = vmatpush1.msra.mxu0 0.0
    %679 = vmatprep.subr.mxu0 0.0
    %680 = vmatpush1.msra.mxu0 0.0
    %681 = vmatprep.subr.mxu0 0.0
    %682 = vmatpush1.msra.mxu0 0.0
    %683 = vmatprep.subr.mxu0 0.0
    %684 = vmatpush1.msra.mxu0 %v652
    %685 = vmatprep.subr.mxu0 0.0
    %686 = vmatpush1.msra.mxu0 %v651
    %687 = vmatprep.subr.mxu0 0.0
    %688 = vmatpush1.msra.mxu0 %v650
    %689 = vmatprep.subr.mxu0 0.0
    %690 = vmatpush1.msra.mxu0 %v649
    %691 = vmatprep.subr.mxu0 0.0
    %692 = vmatpush2.msra.mxu0 0.0
    %693 = vmatprep.subr.mxu0 0.0
    %694 = vmatpush2.msra.mxu0 0.0
    %695 = vmatprep.subr.mxu0 0.0
    %696 = vmatpush2.msra.mxu0 0.0
    %697 = vmatprep.subr.mxu0 0.0
    %698 = vmatpush2.msra.mxu0 0.0
    %699 = vmatprep.subr.mxu0 0.0
    %700 = vmatpush2.msra.mxu0 0.0
    %701 = vmatprep.subr.mxu0 0.0
    %702 = vmatpush2.msra.mxu0 0.0
    %703 = vmatprep.subr.mxu0 0.0
    %704 = vmatpush2.msra.mxu0 0.0
    %705 = vmatprep.subr.mxu0 0.0
    %706 = vmatpush2.msra.mxu0 0.0
    %707 = vmatprep.subr.mxu0 0.0
    %708 = vmatpush2.msra.mxu0 0.0
    %709 = vmatprep.subr.mxu0 0.0
    %710 = vmatpush2.msra.mxu0 0.0
    %711 = vmatprep.subr.mxu0 0.0
    %712 = vmatpush2.msra.mxu0 0.0
    %713 = vmatprep.subr.mxu0 0.0
    %714 = vmatpush2.msra.mxu0 0.0
    %715 = vmatprep.subr.mxu0 0.0
    %716 = vmatpush2.msra.mxu0 0.0
    %717 = vmatprep.subr.mxu0 0.0
    %718 = vmatpush2.msra.mxu0 0.0
    %719 = vmatprep.subr.mxu0 0.0
    %720 = vmatpush2.msra.mxu0 0.0
    %721 = vmatprep.subr.mxu0 0.0
    %722 = vmatpush2.msra.mxu0 0.0
    %723 = vmatprep.mubr.f32.mxu0 0.0
    %724 = vmatmul.mubr.f32.gmra.mxu0 %v654
    %v725 = vpop.f32.mrf.mxu0
    %v726 = vadd.f32 0.0, %v725
    %v727 = vpop.f32.mrf.mxu0
    %728 = vmatprep.mubr.f32.mxu0 0.0
    %729 = vmatmul.mubr.f32.gmra.mxu0 %v657
    %v730 = vpop.f32.mrf.mxu0
    %v731 = vadd.f32 0.0, %v730
    %v732 = vpop.f32.mrf.mxu0
    %733 = vdwg.mxu0
    %v734 = vmax.f32 %v726, 0.0
    %v735 = vmax.f32 %v731, 0.0
    %v736 = vld [vmem:[#allocation11] sm:$0xff]
    %737 = vrot.lane.b32.xlu0 %v647, 96
    %v738 = vpop.permute.xlu0 %737
    %739 = vrot.lane.b32.xlu0 %v648, 96
    %v740 = vpop.permute.xlu0 %739
    %v741 = vsel %vm186, %v738, 0
    %v743 = vsel %vm186, %v740, 0
    %745 = vmatprep.subr.mxu0 0.0
    %746 = vmatpush1.msra.mxu0 0.0
    %747 = vmatprep.subr.mxu0 0.0
    %748 = vmatpush1.msra.mxu0 0.0
    %749 = vmatprep.subr.mxu0 0.0
    %750 = vmatpush1.msra.mxu0 0.0
    %751 = vmatprep.subr.mxu0 0.0
    %752 = vmatpush1.msra.mxu0 0.0
    %753 = vmatprep.subr.mxu0 0.0
    %754 = vmatpush1.msra.mxu0 0.0
    %755 = vmatprep.subr.mxu0 0.0
    %756 = vmatpush1.msra.mxu0 0.0
    %757 = vmatprep.subr.mxu0 0.0
    %758 = vmatpush1.msra.mxu0 0.0
    %759 = vmatprep.subr.mxu0 0.0
    %760 = vmatpush1.msra.mxu0 0.0
    %761 = vmatprep.subr.mxu0 0.0
    %762 = vmatpush1.msra.mxu0 0.0
    %763 = vmatprep.subr.mxu0 0.0
    %764 = vmatpush1.msra.mxu0 0.0
    %765 = vmatprep.subr.mxu0 0.0
    %766 = vmatpush1.msra.mxu0 0.0
    %767 = vmatprep.subr.mxu0 0.0
    %768 = vmatpush1.msra.mxu0 0.0
    %769 = vmatprep.subr.mxu0 0.0
    %770 = vmatpush1.msra.mxu0 0.0
    %771 = vmatprep.subr.mxu0 0.0
    %772 = vmatpush1.msra.mxu0 0.0
    %773 = vmatprep.subr.mxu0 0.0
    %774 = vmatpush1.msra.mxu0 0.0
    %775 = vmatprep.subr.mxu0 0.0
    %776 = vmatpush1.msra.mxu0 %v736
    %777 = vmatprep.subr.mxu0 0.0
    %778 = vmatpush2.msra.mxu0 0.0
    %779 = vmatprep.subr.mxu0 0.0
    %780 = vmatpush2.msra.mxu0 0.0
    %781 = vmatprep.subr.mxu0 0.0
    %782 = vmatpush2.msra.mxu0 0.0
    %783 = vmatprep.subr.mxu0 0.0
    %784 = vmatpush2.msra.mxu0 0.0
    %785 = vmatprep.subr.mxu0 0.0
    %786 = vmatpush2.msra.mxu0 0.0
    %787 = vmatprep.subr.mxu0 0.0
    %788 = vmatpush2.msra.mxu0 0.0
    %789 = vmatprep.subr.mxu0 0.0
    %790 = vmatpush2.msra.mxu0 0.0
    %791 = vmatprep.subr.mxu0 0.0
    %792 = vmatpush2.msra.mxu0 0.0
    %793 = vmatprep.subr.mxu0 0.0
    %794 = vmatpush2.msra.mxu0 0.0
    %795 = vmatprep.subr.mxu0 0.0
    %796 = vmatpush2.msra.mxu0 0.0
    %797 = vmatprep.subr.mxu0 0.0
    %798 = vmatpush2.msra.mxu0 0.0
    %799 = vmatprep.subr.mxu0 0.0
    %800 = vmatpush2.msra.mxu0 0.0
    %801 = vmatprep.subr.mxu0 0.0
    %802 = vmatpush2.msra.mxu0 0.0
    %803 = vmatprep.subr.mxu0 0.0
    %804 = vmatpush2.msra.mxu0 0.0
    %805 = vmatprep.subr.mxu0 0.0
    %806 = vmatpush2.msra.mxu0 0.0
    %807 = vmatprep.subr.mxu0 0.0
    %808 = vmatpush2.msra.mxu0 0.0
    %809 = vmatprep.mubr.f32.mxu0 0.0
    %810 = vmatmul.mubr.f32.gmra.mxu0 %v741
    %v811 = vpop.f32.mrf.mxu0
    %v812 = vadd.f32 0.0, %v811
    %v813 = vpop.f32.mrf.mxu0
    %814 = vmatprep.mubr.f32.mxu0 0.0
    %815 = vmatmul.mubr.f32.gmra.mxu0 %v743
    %v816 = vpop.f32.mrf.mxu0
    %v817 = vadd.f32 0.0, %v816
    %v818 = vpop.f32.mrf.mxu0
    %819 = vdwg.mxu0
    %v820 = vmax.f32 %v812, 0.0
    %v821 = vmax.f32 %v817, 0.0
    %v822 = vadd.f32 %v734, %v820
    %v823 = vadd.f32 %v735, %v821
    %v824 = vld [vmem:[#allocation13] sm:$0xff]
    %v825 = vld [vmem:[#allocation13 + $0x8] sm:$0xff]
    %v826 = vld [vmem:[#allocation13 + $0x10] sm:$0xff]
    %v827 = vld [vmem:[#allocation13 + $0x18] sm:$0xff]
    %v829 = vsel %vm316, %v822, 0
    %v832 = vsel %vm316, %v823, 0
    %834 = vmatprep.subr.mxu0 0.0
    %835 = vmatpush1.msra.mxu0 0.0
    %836 = vmatprep.subr.mxu0 0.0
    %837 = vmatpush1.msra.mxu0 0.0
    %838 = vmatprep.subr.mxu0 0.0
    %839 = vmatpush1.msra.mxu0 0.0
    %840 = vmatprep.subr.mxu0 0.0
    %841 = vmatpush1.msra.mxu0 0.0
    %842 = vmatprep.subr.mxu0 0.0
    %843 = vmatpush1.msra.mxu0 0.0
    %844 = vmatprep.subr.mxu0 0.0
    %845 = vmatpush1.msra.mxu0 0.0
    %846 = vmatprep.subr.mxu0 0.0
    %847 = vmatpush1.msra.mxu0 0.0
    %848 = vmatprep.subr.mxu0 0.0
    %849 = vmatpush1.msra.mxu0 0.0
    %850 = vmatprep.subr.mxu0 0.0
    %851 = vmatpush1.msra.mxu0 0.0
    %852 = vmatprep.subr.mxu0 0.0
    %853 = vmatpush1.msra.mxu0 0.0
    %854 = vmatprep.subr.mxu0 0.0
    %855 = vmatpush1.msra.mxu0 0.0
    %856 = vmatprep.subr.mxu0 0.0
    %857 = vmatpush1.msra.mxu0 0.0
    %858 = vmatprep.subr.mxu0 0.0
    %859 = vmatpush1.msra.mxu0 %v827
    %860 = vmatprep.subr.mxu0 0.0
    %861 = vmatpush1.msra.mxu0 %v826
    %862 = vmatprep.subr.mxu0 0.0
    %863 = vmatpush1.msra.mxu0 %v825
    %864 = vmatprep.subr.mxu0 0.0
    %865 = vmatpush1.msra.mxu0 %v824
    %866 = vmatprep.subr.mxu0 0.0
    %867 = vmatpush2.msra.mxu0 0.0
    %868 = vmatprep.subr.mxu0 0.0
    %869 = vmatpush2.msra.mxu0 0.0
    %870 = vmatprep.subr.mxu0 0.0
    %871 = vmatpush2.msra.mxu0 0.0
    %872 = vmatprep.subr.mxu0 0.0
    %873 = vmatpush2.msra.mxu0 0.0
    %874 = vmatprep.subr.mxu0 0.0
    %875 = vmatpush2.msra.mxu0 0.0
    %876 = vmatprep.subr.mxu0 0.0
    %877 = vmatpush2.msra.mxu0 0.0
    %878 = vmatprep.subr.mxu0 0.0
    %879 = vmatpush2.msra.mxu0 0.0
    %880 = vmatprep.subr.mxu0 0.0
    %881 = vmatpush2.msra.mxu0 0.0
    %882 = vmatprep.subr.mxu0 0.0
    %883 = vmatpush2.msra.mxu0 0.0
    %884 = vmatprep.subr.mxu0 0.0
    %885 = vmatpush2.msra.mxu0 0.0
    %886 = vmatprep.subr.mxu0 0.0
    %887 = vmatpush2.msra.mxu0 0.0
    %888 = vmatprep.subr.mxu0 0.0
    %889 = vmatpush2.msra.mxu0 0.0
    %890 = vmatprep.subr.mxu0 0.0
    %891 = vmatpush2.msra.mxu0 0.0
    %892 = vmatprep.subr.mxu0 0.0
    %893 = vmatpush2.msra.mxu0 0.0
    %894 = vmatprep.subr.mxu0 0.0
    %895 = vmatpush2.msra.mxu0 0.0
    %896 = vmatprep.subr.mxu0 0.0
    %897 = vmatpush2.msra.mxu0 0.0
    %898 = vmatprep.mubr.f32.mxu0 0.0
    %899 = vmatmul.mubr.f32.gmra.mxu0 %v829
    %v900 = vpop.f32.mrf.mxu0
    %v901 = vadd.f32 0.0, %v900
    %v902 = vpop.f32.mrf.mxu0
    %903 = vmatprep.mubr.f32.mxu0 0.0
    %904 = vmatmul.mubr.f32.gmra.mxu0 %v832
    %v905 = vpop.f32.mrf.mxu0
    %v906 = vadd.f32 0.0, %v905
    %v907 = vpop.f32.mrf.mxu0
    %908 = vdwg.mxu0
    %v909 = vmul.f32 %v596, %v901
    %v910 = vmul.f32 %v601, %v906
    %v911 = vpack.c.bf16 %v910, %v909
    %912 = vmatprep.subr.bf16.mxu0 0
    %913 = vmatpush1.bf16.msra.mxu0 0
    %914 = vmatprep.subr.bf16.mxu0 0
    %915 = vmatpush1.bf16.msra.mxu0 0
    %916 = vmatprep.subr.bf16.mxu0 0
    %917 = vmatpush1.bf16.msra.mxu0 0
    %918 = vmatprep.subr.bf16.mxu0 0
    %919 = vmatpush1.bf16.msra.mxu0 0
    %920 = vmatprep.subr.bf16.mxu0 0
    %921 = vmatpush1.bf16.msra.mxu0 0
    %922 = vmatprep.subr.bf16.mxu0 0
    %923 = vmatpush1.bf16.msra.mxu0 0
    %924 = vmatprep.subr.bf16.mxu0 0
    %925 = vmatpush1.bf16.msra.mxu0 0
    %926 = vmatprep.subr.bf16.mxu0 0
    %927 = vmatpush1.bf16.msra.mxu0 %v911
    %928 = vmatprep.subr.bf16.mxu0 0
    %929 = vmatpush2.bf16.msra.mxu0 0
    %930 = vmatprep.subr.bf16.mxu0 0
    %931 = vmatpush2.bf16.msra.mxu0 0
    %932 = vmatprep.subr.bf16.mxu0 0
    %933 = vmatpush2.bf16.msra.mxu0 0
    %934 = vmatprep.subr.bf16.mxu0 0
    %935 = vmatpush2.bf16.msra.mxu0 0
    %936 = vmatprep.subr.bf16.mxu0 0
    %937 = vmatpush2.bf16.msra.mxu0 0
    %938 = vmatprep.subr.bf16.mxu0 0
    %939 = vmatpush2.bf16.msra.mxu0 0
    %940 = vmatprep.subr.bf16.mxu0 0
    %941 = vmatpush2.bf16.msra.mxu0 0
    %942 = vmatprep.subr.bf16.mxu0 0
    %943 = vmatpush2.bf16.msra.mxu0 0
    %944 = vmatprep.mubr.bf16.mxu0 0
    %945 = vmatmul.mubr.bf16.gmra.mxu0 %v536
    %v946 = vpop.f32.mrf.mxu0
    %v947 = vadd.f32 0.0, %v946
    %v948 = vpop.f32.mrf.mxu0
    %v949 = vpop.f32.mrf.mxu0
    %v950 = vadd.f32 0.0, %v949
    %v951 = vpop.f32.mrf.mxu0
    %952 = vdwg.mxu0
    %v953 = vmul.f32 %v596, %v947
    %v954 = vmul.f32 %v601, %v950
    %v955 = vmul.f32 %v390, 0.5
    %v956 = vmul.f32 %v395, 0.5
    %v957 = vmul.f32 %v953, 0.5
    %v958 = vmul.f32 %v954, 0.5
    %v959 = vadd.f32 %v955, %v957
    %v960 = vadd.f32 %v956, %v958
    %v961 = vpack.c.bf16 %v960, %v959
    %v963 = vsel %vm316, %v961, 0
    %965 = vmatprep.subr.bf16.mxu0 0
    %966 = vmatpush1.bf16.xpose.msra.mxu0 0
    %967 = vmatprep.subr.bf16.mxu0 0
    %968 = vmatpush1.bf16.xpose.msra.mxu0 0
    %969 = vmatprep.subr.bf16.mxu0 0
    %970 = vmatpush1.bf16.xpose.msra.mxu0 0
    %971 = vmatprep.subr.bf16.mxu0 0
    %972 = vmatpush1.bf16.xpose.msra.mxu0 0
    %973 = vmatprep.subr.bf16.mxu0 0
    %974 = vmatpush1.bf16.xpose.msra.mxu0 0
    %975 = vmatprep.subr.bf16.mxu0 0
    %976 = vmatpush1.bf16.xpose.msra.mxu0 0
    %977 = vmatprep.subr.bf16.mxu0 0
    %978 = vmatpush1.bf16.xpose.msra.mxu0 0
    %979 = vmatprep.subr.bf16.mxu0 0
    %980 = vmatpush1.bf16.xpose.msra.mxu0 %v963
    %981 = vmatprep.subr.bf16.mxu0 0
    %982 = vmatpush2.bf16.xpose.msra.mxu0 0
    %983 = vmatprep.subr.bf16.mxu0 0
    %984 = vmatpush2.bf16.xpose.msra.mxu0 0
    %985 = vmatprep.subr.bf16.mxu0 0
    %986 = vmatpush2.bf16.xpose.msra.mxu0 0
    %987 = vmatprep.subr.bf16.mxu0 0
    %988 = vmatpush2.bf16.xpose.msra.mxu0 0
    %989 = vmatprep.subr.bf16.mxu0 0
    %990 = vmatpush2.bf16.xpose.msra.mxu0 0
    %991 = vmatprep.subr.bf16.mxu0 0
    %992 = vmatpush2.bf16.xpose.msra.mxu0 0
    %993 = vmatprep.subr.bf16.mxu0 0
    %994 = vmatpush2.bf16.xpose.msra.mxu0 0
    %995 = vmatprep.subr.bf16.mxu0 0
    %996 = vmatpush2.bf16.xpose.msra.mxu0 0
    %997 = vmatprep.mubr.bf16.mxu0 0
    %998 = vmatmul.mubr.bf16.gmra.mxu0 %v963
    %v999 = vpop.f32.mrf.mxu0
    %v1000 = vadd.f32 0.0, %v999
    %v1001 = vpop.f32.mrf.mxu0
    %v1002 = vpop.f32.mrf.mxu0
    %v1003 = vadd.f32 0.0, %v1002
    %v1004 = vpop.f32.mrf.mxu0
    %1005 = vdwg.mxu0
    %1006 = vst.msk [vmem:[#allocation14] sm:$0xff] %vm140, %v1000
    %1007 = vst.msk [vmem:[#allocation14 + $0x8] sm:$0xff] %vm140, %v1003
    // Predicated region
    $region66: #{tpu_custom_call.1} parent=1 // pred_check
      _
    $region67: #{tpu_custom_call.1} parent=1 // pred_check_branch
      %1009 = sbr.rel (0) target = $region69
    $region68: #{tpu_custom_call.1} parent=1 // pred_region
      %s1011 = ssub.s32 256, 256
      %1012 = vsyncadd [#allocation4], %s1011
      %s1013 = sshll.u32 [#allocation14], 4
      %s1014 = int_to_ptr.vmem [resolvable:$true] %s1013
      %1019 = dma.vmem_to_hbm [thread:$0]  %s1014, 256, %s9, [#allocation4], 128, 128, 8
    $region69: #{tpu_custom_call.1} parent=1 // pred_fallthru
      _
    // Predicated region
    $region70: #{tpu_custom_call.1} parent=1 // pred_check
      _
    $region71: #{tpu_custom_call.1} parent=1 // pred_check_branch
      %1021 = sbr.rel (0) target = $region73
    $region72: #{tpu_custom_call.1} parent=1 // pred_region
      %s1023 = ssub.s32 256, 256
      %1024 = vsyncadd [#allocation16], %s1023
      %s1025 = sshll.u32 [#allocation15], 4
      %s1026 = int_to_ptr.vmem [resolvable:$true] %s1025
      %1031 = dma.vmem_to_hbm [thread:$0]  %s1026, 256, %s10, [#allocation16], 128, 128, 8
    $region73: #{tpu_custom_call.1} parent=1 // pred_fallthru
      _
    // Predicated region
    $region74: #{tpu_custom_call.1} parent=1 // pred_check
      _
    $region75: #{tpu_custom_call.1} parent=1 // pred_check_branch
      %1033 = sbr.rel (0) target = $region77
    $region76: #{tpu_custom_call.1} parent=1 // pred_region
      %s1035 = ssub.s32 256, 256
      %1036 = vsyncadd [#allocation16], %s1035
      %s1037 = sshll.u32 [#allocation17], 4
      %s1038 = int_to_ptr.vmem [resolvable:$true] %s1037
      %1043 = dma.vmem_to_hbm [thread:$0]  %s1038, 256, %s11, [#allocation16], 128, 128, 8
    $region77: #{tpu_custom_call.1} parent=1 // pred_fallthru
      _
    // Predicated region
    $region78: #{tpu_custom_call.1} parent=1 // pred_check
      _
    $region79: #{tpu_custom_call.1} parent=1 // pred_check_branch
      %1045 = sbr.rel (0) target = $region81
    $region80: #{tpu_custom_call.1} parent=1 // pred_region
      %1046 = dma.done [#allocation4], 256
    $region81: #{tpu_custom_call.1} parent=1 // pred_fallthru
      _
    // Predicated region
    $region82: #{tpu_custom_call.1} parent=1 // pred_check
      _
    $region83: #{tpu_custom_call.1} parent=1 // pred_check_branch
      %1048 = sbr.rel (0) target = $region85
    $region84: #{tpu_custom_call.1} parent=1 // pred_region
      %1049 = dma.done [#allocation16], 256
    $region85: #{tpu_custom_call.1} parent=1 // pred_fallthru
      _
    // Predicated region
    $region86: #{tpu_custom_call.1} parent=1 // pred_check
      _
    $region87: #{tpu_custom_call.1} parent=1 // pred_check_branch
      %1051 = sbr.rel (0) target = $region89
    $region88: #{tpu_custom_call.1} parent=1 // pred_region
      %1052 = dma.done [#allocation16], 256
    $region89: #{tpu_custom_call.1} parent=1 // pred_fallthru
      _
    %1053 = vsyncpa [#allocation3], 1
    %1054 = vsyncpa [#allocation6], 1
    %1055 = vsyncpa [#allocation9], 1
    %1056 = vsyncpa [#allocation12], 1
    %1057 = vsyncpa [#allocation4], 1
    %1058 = vsyncpa [#allocation16], 1

</llo_original>
